<compile_context>
chip_gen: v7x
topology: tpu7x:2x2x1
jax: 0.10.0
libtpu: 0.0.40
codegen_flags: <defaults>
</compile_context>

<pallas_src>
import jax
import jax.numpy as jnp
from jax.experimental import pallas as pl
from jax.experimental.pallas import tpu as pltpu


def _round_up(x, m):
    return ((x + m - 1) // m) * m


# ----------------------------- Pallas kernel ------------------------------ #
def _bernoulli_head_kernel(x_ref, w_ref, b_ref, logits_ref):
    # x_ref:      (TB, K)      VMEM  (batch tile; f32 or bf16)
    # w_ref:      (K, N_pad)   VMEM  (resident across grid steps)
    # b_ref:      (1, N_pad)   VMEM  (resident across grid steps; f32)
    # logits_ref: (TB, N_pad)  VMEM  (lane-dense: N_pad % 128 == 0; f32)
    logits_ref[...] = (
        jnp.dot(x_ref[...], w_ref[...], preferred_element_type=jnp.float32)
        + b_ref[...]
    )


# --------------------------- tile / grid choice ---------------------------- #
def _select_batch_tile(B, K, N_pad, tb_max, vmem_budget_bytes, x_elem_bytes):
    """Pick the batch tile TB and padded batch B_pad.

    * Balanced tiles: TB ~= cdiv(B, n_tiles) rounded up to 8 sublanes, so
      padding waste is bounded to <8 rows per tile (no B_pad blow-up).
    * >= 2 grid steps whenever B >= 16 so dimension_semantics=("parallel",)
      can shard across the 2 TensorCores of a v7x chip.
    * TB also capped so the double-buffered x/logits tiles (+ resident W, bias)
      fit in the VMEM budget.
    """
    B8 = _round_up(B, 8)

    fixed = 2 * K * N_pad * x_elem_bytes + 2 * N_pad * 4        # W + bias (2 bufs)
    per_row = 2 * (K * x_elem_bytes + N_pad * 4)                # x + out (2 bufs)
    tb_cap = max(8, ((vmem_budget_bytes - fixed) // per_row) // 8 * 8)
    tb_eff = max(8, min((tb_max // 8) * 8, tb_cap))

    n_tiles = max(1, pl.cdiv(B8, tb_eff))
    if B8 >= 16 and n_tiles < 2:
        n_tiles = 2                                             # feed both v7x TCs
    TB = min(tb_eff, _round_up(pl.cdiv(B8, n_tiles), 8))
    B_pad = _round_up(B, TB)
    return TB, B_pad


# ------------------------------ head wrapper ------------------------------- #
def bernoulli_head_logits_padded(x, weight, bias, *, tb_max=2048,
                                 vmem_budget_bytes=40 * 1024 * 1024,
                                 use_bf16_inputs=False):
    """Tiled Pallas head.  Returns (padded logits (B_pad, N_pad) f32, B, N).

    x:      (B, num_inputs)               float32
    weight: (num_inputs, num_outputs)     float32  (computes x @ W + b)
    bias:   (num_outputs,)                float32
    """
    B, K = x.shape
    N = weight.shape[1]

    x_elem_bytes = 2 if use_bf16_inputs else jnp.dtype(x.dtype).itemsize

    # Lane-dense output width (kills masked partial stores for small N).
    N_pad = _round_up(max(N, 128), 128)
    TB, B_pad = _select_batch_tile(B, K, N_pad, tb_max, vmem_budget_bytes,
                                   x_elem_bytes)

    if use_bf16_inputs:
        x = x.astype(jnp.bfloat16)
        weight = weight.astype(jnp.bfloat16)
    if B_pad != B:
        x = jnp.pad(x, ((0, B_pad - B), (0, 0)))
    if N_pad != N:
        weight = jnp.pad(weight, ((0, 0), (0, N_pad - N)))
        bias = jnp.pad(bias, ((0, N_pad - N),))
    bias2d = bias.reshape(1, N_pad).astype(jnp.float32)

    grid = (B_pad // TB,)

    # VMEM limit from the real double-buffered footprint (not a hard-coded
    # 32 MiB), with 2x headroom for compiler scratch, capped for v7x (64 MiB).
    footprint = (2 * TB * K * x_elem_bytes          # x tiles (double-buffered)
                 + 2 * TB * N_pad * 4               # logits tiles
                 + 2 * K * N_pad * x_elem_bytes     # W (default double-buffer)
                 + 2 * N_pad * 4)                   # bias
    vmem_limit = int(min(48 * 1024 * 1024, max(8 * 1024 * 1024, 2 * footprint)))

    flops = 2 * B_pad * K * N_pad
    bytes_accessed = int(B_pad * K * x_elem_bytes + K * N_pad * x_elem_bytes
                         + N_pad * 4 + B_pad * N_pad * 4)

    logits = pl.pallas_call(
        _bernoulli_head_kernel,
        out_shape=jax.ShapeDtypeStruct((B_pad, N_pad), jnp.float32),
        grid=grid,
        in_specs=[
            pl.BlockSpec((TB, K), lambda i: (i, 0)),        # x: batch-tiled
            pl.BlockSpec((K, N_pad), lambda i: (0, 0)),     # W: VMEM-resident
            pl.BlockSpec((1, N_pad), lambda i: (0, 0)),     # b: VMEM-resident
        ],
        out_specs=pl.BlockSpec((TB, N_pad), lambda i: (i, 0)),
        compiler_params=pltpu.CompilerParams(
            dimension_semantics=("parallel",),
            vmem_limit_bytes=vmem_limit,
        ),
        cost_estimate=pl.CostEstimate(
            flops=flops, transcendentals=0, bytes_accessed=bytes_accessed),
    )(x, weight, bias2d)

    return logits, B, N


def bernoulli_head_logits(x, weight, bias, **kwargs):
    """Convenience wrapper returning the (B, N) logits (slice of padded out)."""
    logits_padded, B, N = bernoulli_head_logits_padded(x, weight, bias, **kwargs)
    return logits_padded[:B, :N]


# ------------------------ FixedBernoulli (JAX glue) ------------------------ #
class FixedBernoulli:
    """Mirrors the PyTorch FixedBernoulli API on top of the kernel logits.

    probs / entropy / log_probs are thin, lazily-evaluated elementwise JAX ops
    over the single (B, N) logits array produced by the Pallas kernel; when
    the whole head + epilogue is jitted these fuse with the padding slice.
    """

    def __init__(self, logits):
        self.logits = logits

    @property
    def probs(self):
        return jax.nn.sigmoid(self.logits)

    def log_probs(self, actions):
        lp = (actions * jax.nn.log_sigmoid(self.logits)
              + (1.0 - actions) * jax.nn.log_sigmoid(-self.logits))
        return lp.reshape(actions.shape[0], -1).sum(-1)[:, None]

    def entropy(self):
        p = self.probs
        ent = -(p * jax.nn.log_sigmoid(self.logits)
                + (1.0 - p) * jax.nn.log_sigmoid(-self.logits))
        return ent.sum(-1)

    def mode(self):
        return (self.probs > 0.5).astype(jnp.float32)


# ------------------------------- Module ----------------------------------- #
class Bernoulli:
    """JAX/Pallas port of the PyTorch Bernoulli action head."""

    def __init__(self, num_inputs, num_outputs, use_orthogonal=True, gain=0.01,
                 key=None, use_bf16_inputs=False):
        if key is None:
            key = jax.random.PRNGKey(0)
        if use_orthogonal:
            w = jax.nn.initializers.orthogonal(scale=gain)(
                key, (num_inputs, num_outputs), jnp.float32)
        else:
            w = jax.nn.initializers.glorot_uniform()(
                key, (num_inputs, num_outputs), jnp.float32) * gain
        self.weight = w                                      # (in, out)
        self.bias = jnp.zeros((num_outputs,), jnp.float32)   # constant 0 init
        self.use_bf16_inputs = use_bf16_inputs

    def __call__(self, x):
        logits_padded, B, N = bernoulli_head_logits_padded(
            x, self.weight, self.bias, use_bf16_inputs=self.use_bf16_inputs)
        # The slice of the lane-padded logits fuses into the downstream
        # sigmoid/log_sigmoid consumers when __call__ is jitted together with
        # them (no separate HBM pass over the padded array).
        return FixedBernoulli(logits_padded[:B, :N])


# -------------------------------- Main ------------------------------------ #
if __name__ == "__main__":
    key = jax.random.PRNGKey(0)
    k_x, k_w, k_a = jax.random.split(key, 3)

    batch, num_inputs, num_outputs = 20, 32, 16
    x = jax.random.normal(k_x, (batch, num_inputs), jnp.float32)

    head = Bernoulli(num_inputs, num_outputs, use_orthogonal=True, gain=0.01,
                     key=k_w)

    # --- eager path -------------------------------------------------------- #
    dist = head(x)
    jax.block_until_ready(dist.logits)
    ref_logits = x @ head.weight + head.bias
    assert jnp.allclose(dist.logits, ref_logits, atol=1e-5, rtol=1e-5)

    # --- jitted path: kernel + pad-slice + distribution epilogue fuse ------ #
    @jax.jit
    def fused_step(xb, actions):
        d = head(xb)
        return d.logits, d.log_probs(actions), d.entropy(), d.mode()

    actions = (jax.random.uniform(k_a, (batch, num_outputs)) > 0.5).astype(
        jnp.float32)
    logits_j, lp, ent, mode = jax.block_until_ready(fused_step(x, actions))
    assert jnp.allclose(logits_j, ref_logits, atol=1e-5, rtol=1e-5)
    assert lp.shape == (batch, 1) and ent.shape == (batch,)
    assert mode.shape == (batch, num_outputs)
    assert bool(jnp.isfinite(lp).all()) and bool(jnp.isfinite(ent).all())

    # --- optional bf16-input path (halved HBM reads, f32 accumulation) ----- #
    logits_bf16 = bernoulli_head_logits(x, head.weight, head.bias,
                                        use_bf16_inputs=True)
    jax.block_until_ready(logits_bf16)
    assert jnp.allclose(logits_bf16, ref_logits, atol=1e-2)

    print("KERNEL_OK")
</pallas_src>

<mosaic_0001>
module attributes {stable_mosaic.version = 11 : i64} {
  func.func @_bernoulli_head_kernel(%arg0: i32, %arg1: memref<16x32xf32, #tpu.memory_space<vmem>>, %arg2: memref<32x128xf32, #tpu.memory_space<vmem>>, %arg3: memref<1x128xf32, #tpu.memory_space<vmem>>, %arg4: memref<16x128xf32, #tpu.memory_space<vmem>>) attributes {dimension_semantics = [#tpu.dimension_semantics<parallel>], iteration_bounds = array<i64: 2>, scalar_prefetch = 0 : i64, scratch_operands = 0 : i64, tpu.core_type = #tpu.core_type<tc>, window_params = [{transform_indices = @transform_0, window_bounds = array<i64: 16, 32>}, {pipeline_mode = #tpu.pipeline_mode<synchronous>, transform_indices = @transform_1, window_bounds = array<i64: 32, 128>}, {pipeline_mode = #tpu.pipeline_mode<synchronous>, transform_indices = @transform_2, window_bounds = array<i64: 1, 128>}, {transform_indices = @transform_3, window_bounds = array<i64: 16, 128>}]} {
    %c0 = arith.constant 0 : index
    %c0_0 = arith.constant 0 : index
    %0 = vector.load %arg1[%c0, %c0_0] : memref<16x32xf32, #tpu.memory_space<vmem>>, vector<16x32xf32>
    %c0_1 = arith.constant 0 : index
    %c0_2 = arith.constant 0 : index
    %1 = vector.load %arg2[%c0_1, %c0_2] : memref<32x128xf32, #tpu.memory_space<vmem>>, vector<32x128xf32>
    %cst = arith.constant dense<0.000000e+00> : vector<16x128xf32>
    %2 = tpu.matmul %0, %1, %cst {dimension_numbers = #tpu.dot_dimension_numbers<[1], [0], [0], [1], [0, 0, 1, 1], [], []>} : vector<16x32xf32>, vector<32x128xf32>, vector<16x128xf32> -> vector<16x128xf32>
    %c0_3 = arith.constant 0 : index
    %c0_4 = arith.constant 0 : index
    %3 = vector.load %arg3[%c0_3, %c0_4] : memref<1x128xf32, #tpu.memory_space<vmem>>, vector<1x128xf32>
    %4 = vector.broadcast %3 : vector<1x128xf32> to vector<16x128xf32>
    %5 = arith.addf %2, %4 : vector<16x128xf32>
    %c0_5 = arith.constant 0 : index
    %c0_6 = arith.constant 0 : index
    %6 = vector.load %arg4[%c0_5, %c0_6] : memref<16x128xf32, #tpu.memory_space<vmem>>, vector<16x128xf32>
    tpu.vector_store %arg4[%c0_5, %c0_6], %5 {strides = array<i32>} : memref<16x128xf32, #tpu.memory_space<vmem>>, vector<16x128xf32>,
    return
  }
  func.func @transform_0(%arg0: i32) -> (i32, i32) {
    %c0_i32 = arith.constant 0 : i32
    %c0_i32_0 = arith.constant 0 : i32
    return %arg0, %c0_i32 : i32, i32
  }
  func.func @transform_1(%arg0: i32) -> (i32, i32) {
    %c0_i32 = arith.constant 0 : i32
    %c0_i32_0 = arith.constant 0 : i32
    %c0_i32_1 = arith.constant 0 : i32
    return %c0_i32, %c0_i32_0 : i32, i32
  }
  func.func @transform_2(%arg0: i32) -> (i32, i32) {
    %c0_i32 = arith.constant 0 : i32
    %c0_i32_0 = arith.constant 0 : i32
    %c0_i32_1 = arith.constant 0 : i32
    return %c0_i32, %c0_i32_0 : i32, i32
  }
  func.func @transform_3(%arg0: i32) -> (i32, i32) {
    %c0_i32 = arith.constant 0 : i32
    %c0_i32_0 = arith.constant 0 : i32
    return %arg0, %c0_i32 : i32, i32
  }
}

</mosaic_0001>

<llo_original>
// kernel: tpu_custom_call.1
$region0: #{tpu_custom_call.1}
  #allocation0 [shape = 'u32[]', space=smem, size = 0x4, offset = 0x4, fixed_abs, tag = 'smem constant byte address 0x4 - core index']
  #allocation1 [shape = 'u32[144,128]{1,0:T(1,128)}', space=vmem, size = 0x12000, scoped, tag = 'internal scratch']
  %s0 = inlined_call_operand.hbm [shape: f32[32,32], index: 0, kind: input, shape index: {}]
  %s1 = inlined_call_operand.hbm [shape: f32[32,128], index: 1, kind: input, shape index: {}]
  %s2 = inlined_call_operand.vmem [shape: f32[1,128], index: 2, kind: input, shape index: {}]
  %s3 = inlined_call_operand.hbm [shape: f32[32,128], index: 3, kind: output, shape index: {}]
  %s4 = sld [smem:[#allocation0]]
  $region53: #{tpu_custom_call.1} parent=0
    _
  %s6 = ssub.s32 1, %s4
  %s7 = scalar_select 0, %s6, %s4
  $region1: #{tpu_custom_call.1} parent=0
    #allocation2 [shape = 'u8[16384]{0}', space=vmem, size = 0x4000, scoped, tag = 'input window, operand 0']
    #allocation3 [shape = 's32[2]{0}', space=sflag, size = 0x8, scoped, tag = 'scoped memory for tpu_custom_call.1']
    #allocation4 [shape = 's32[2]{0}', space=sflag, size = 0x8, scoped, tag = 'scoped memory for tpu_custom_call.1']
    #allocation5 [shape = 'u8[16384]{0}', space=vmem, size = 0x4000, scoped, tag = 'input window, operand 1, single buffered']
    #allocation6 [shape = 's32[1]{0}', space=sflag, size = 0x4, scoped, tag = 'scoped memory for tpu_custom_call.1']
    #allocation7 [shape = 'u8[16384]{0}', space=vmem, size = 0x4000, scoped, tag = 'output window, operand 0']
    %8 = vsyncpa [#allocation3], 0
    %s9 = scalar_lea.sflag [#allocation3], 1
    %10 = vsyncpa %s9, 0
    %11 = vsyncpa [#allocation6], 0
    %12 = vsyncpa [#allocation4], 0
    %s13 = scalar_lea.sflag [#allocation4], 1
    %14 = vsyncpa %s13, 0
    loop: start=0, step=1, limit=4
    $region2: #{tpu_custom_call.1} parent=1 // loop_pre_header
      _
    $region3: #{tpu_custom_call.1} parent=1 // loop_header
      %s16 = sphi 0, %s20
      %p17 = scmp.ge.s32.totalorder %s16, 4
      %s26 = sphi 0, %s28
      %s29 = sphi 0, %s26
      %s30 = sphi 0, %s29
      %s46 = sphi 0, %s30
      %s50 = sphi 0, %s50
      %s52 = sphi 0, %s50
      %s53 = sphi 0, %s52
      %s67 = sphi 0, %s53
      %s71 = sphi 0, %s71
      %s73 = sphi 0, %s71
      %s74 = sphi 0, %s73
      %s88 = sphi 0, %s74
      %s94 = sphi 0, %s96
      %s97 = sphi 0, %s94
      %s98 = sphi 0, %s97
      %s114 = sphi 0, %s98
    $region4: #{tpu_custom_call.1} parent=1 // loop_header_branch
      %19 = sbr.rel (%p17) target = $region8
    $region5: #{tpu_custom_call.1} parent=1 // loop_body
      %s21 = ssub.s32 %s16, 1
      %s22 = ssub.s32 %s16, 2
      %s23 = sadd.s32 %s16, 1
      %s24 = ssub.s32 %s16, %s23
      %p25 = scmp.eq.s32.totalorder %s24, 0
      %s27 = sadd.s32 %s26, 1
      %s28 = scalar_select %p25, %s26, %s27
      %p31 = pneg %p25
      %p32 = scmp.eq.s32.totalorder %s16, 1
      %p33 = por %p31, %p32
      %p34 = scmp.ne.s32.totalorder %s26, %s29
      %p35 = scmp.eq.s32.totalorder %s16, 0
      %p36 = por %p34, %p35
      %p37 = scmp.ne.s32.totalorder %s26, %s29
      %p38 = scmp.eq.s32.totalorder %s21, 1
      %p39 = por %p37, %p38
      %p40 = scmp.ne.s32.totalorder %s29, %s30
      %p41 = scmp.eq.s32.totalorder %s21, 0
      %p42 = por %p40, %p41
      %p43 = scmp.ne.s32.totalorder %s29, %s30
      %p44 = scmp.eq.s32.totalorder %s22, 1
      %p45 = por %p43, %p44
      %p47 = scmp.ne.s32.totalorder %s30, %s46
      %p48 = scmp.eq.s32.totalorder %s22, 0
      %p49 = por %p47, %p48
      %s51 = sadd.s32 %s50, 1
      %p54 = scmp.eq.s32.totalorder %s16, 1
      %p55 = scmp.ne.s32.totalorder %s50, %s52
      %p56 = scmp.eq.s32.totalorder %s16, 0
      %p57 = por %p55, %p56
      %p58 = scmp.ne.s32.totalorder %s50, %s52
      %p59 = scmp.eq.s32.totalorder %s21, 1
      %p60 = por %p58, %p59
      %p61 = scmp.ne.s32.totalorder %s52, %s53
      %p62 = scmp.eq.s32.totalorder %s21, 0
      %p63 = por %p61, %p62
      %p64 = scmp.ne.s32.totalorder %s52, %s53
      %p65 = scmp.eq.s32.totalorder %s22, 1
      %p66 = por %p64, %p65
      %p68 = scmp.ne.s32.totalorder %s53, %s67
      %p69 = scmp.eq.s32.totalorder %s22, 0
      %p70 = por %p68, %p69
      %s72 = sadd.s32 %s71, 1
      %p75 = scmp.eq.s32.totalorder %s16, 1
      %p76 = scmp.ne.s32.totalorder %s71, %s73
      %p77 = scmp.eq.s32.totalorder %s16, 0
      %p78 = por %p76, %p77
      %p79 = scmp.ne.s32.totalorder %s71, %s73
      %p80 = scmp.eq.s32.totalorder %s21, 1
      %p81 = por %p79, %p80
      %p82 = scmp.ne.s32.totalorder %s73, %s74
      %p83 = scmp.eq.s32.totalorder %s21, 0
      %p84 = por %p82, %p83
      %p85 = scmp.ne.s32.totalorder %s73, %s74
      %p86 = scmp.eq.s32.totalorder %s22, 1
      %p87 = por %p85, %p86
      %p89 = scmp.ne.s32.totalorder %s74, %s88
      %p90 = scmp.eq.s32.totalorder %s22, 0
      %p91 = por %p89, %p90
      %s92 = ssub.s32 %s16, %s23
      %p93 = scmp.eq.s32.totalorder %s92, 0
      %s95 = sadd.s32 %s94, 1
      %s96 = scalar_select %p93, %s94, %s95
      %p99 = pneg %p93
      %p100 = scmp.eq.s32.totalorder %s16, 1
      %p101 = por %p99, %p100
      %p102 = scmp.ne.s32.totalorder %s94, %s97
      %p103 = scmp.eq.s32.totalorder %s16, 0
      %p104 = por %p102, %p103
      %p105 = scmp.ne.s32.totalorder %s94, %s97
      %p106 = scmp.eq.s32.totalorder %s21, 1
      %p107 = por %p105, %p106
      %p108 = scmp.ne.s32.totalorder %s97, %s98
      %p109 = scmp.eq.s32.totalorder %s21, 0
      %p110 = por %p108, %p109
      %p111 = scmp.ne.s32.totalorder %s97, %s98
      %p112 = scmp.eq.s32.totalorder %s22, 1
      %p113 = por %p111, %p112
      %p115 = scmp.ne.s32.totalorder %s98, %s114
      %p116 = scmp.eq.s32.totalorder %s22, 0
      %p117 = por %p115, %p116
      %p118 = scmp.le.s32.totalorder 1, %s16
      %p119 = scmp.lt.s32.totalorder %s16, 3
      %p120 = pnand %p118, %p119
      %p121 = pneg %p120
      // Predicated region
      $region9: #{tpu_custom_call.1} parent=5 // pred_check
        _
      $region10: #{tpu_custom_call.1} parent=5 // pred_check_branch
        %123 = sbr.rel (%p120) target = $region12
      $region11: #{tpu_custom_call.1} parent=5 // pred_region
        %s124 = ssub.s32 %s16, 1
        // Predicated region
        $region13: #{tpu_custom_call.1} parent=11 // pred_check
          %p125 = pneg %p63
        $region14: #{tpu_custom_call.1} parent=11 // pred_check_branch
          %127 = sbr.rel (%p125) target = $region16
        $region15: #{tpu_custom_call.1} parent=11 // pred_region
          %s129 = ssub.s32 512, 512
          %130 = vsyncadd [#allocation6], %s129
          %s131 = sshll.u32 [#allocation5], 4
          %s132 = int_to_ptr.vmem [resolvable:$true] %s131
          %137 = dma.hbm_to_vmem [thread:$0]  %s1, 512, %s132, [#allocation6], 128, 128, 8
        $region16: #{tpu_custom_call.1} parent=11 // pred_fallthru
          _
        // Predicated region
        $region17: #{tpu_custom_call.1} parent=11 // pred_check
          %p138 = pneg %p84
        $region18: #{tpu_custom_call.1} parent=11 // pred_check_branch
          %140 = sbr.rel (%p138) target = $region20
        $region19: #{tpu_custom_call.1} parent=11 // pred_region
          _
        $region20: #{tpu_custom_call.1} parent=11 // pred_fallthru
          _
      $region12: #{tpu_custom_call.1} parent=5 // pred_fallthru
        _
      %p141 = scmp.lt.s32.totalorder %s16, 2
      // Predicated region
      $region21: #{tpu_custom_call.1} parent=5 // pred_check
        %p142 = pneg %p141
      $region22: #{tpu_custom_call.1} parent=5 // pred_check_branch
        %144 = sbr.rel (%p142) target = $region24
      $region23: #{tpu_custom_call.1} parent=5 // pred_region
        // Predicated region
        $region25: #{tpu_custom_call.1} parent=23 // pred_check
          %p145 = pneg %p36
        $region26: #{tpu_custom_call.1} parent=23 // pred_check_branch
          %147 = sbr.rel (%p145) target = $region28
        $region27: #{tpu_custom_call.1} parent=23 // pred_region
          %s148 = sand.u32 %s26, 1
          %s149 = scalar_lea.sflag [#allocation3], %s148
          %s150 = sand.u32 %s26, 1
          %s151 = smul.addr %s150, 16
          %s152 = scalar_lea.vmem [#allocation2], %s151
          %s153 = smul.u32 2, %s16
          %s155 = ssub.s32 256, 256
          %156 = vsyncadd %s149, %s155
          %s157 = smul.addr %s153, 128
          %s158 = scalar_lea.hbm %s0, %s157
          %s159 = sshll.u32 %s152, 4
          %s160 = int_to_ptr.vmem [resolvable:$true] %s159
          %165 = dma.hbm_to_vmem [thread:$0]  %s158, 256, %s160, %s149, 128, 128, 8
        $region28: #{tpu_custom_call.1} parent=23 // pred_fallthru
          _
      $region24: #{tpu_custom_call.1} parent=5 // pred_fallthru
        _
      %p166 = scmp.le.s32.totalorder 1, %s16
      %p167 = scmp.lt.s32.totalorder %s16, 3
      %p168 = pnand %p166, %p167
      %p169 = pneg %p168
      // Predicated region
      $region29: #{tpu_custom_call.1} parent=5 // pred_check
        _
      $region30: #{tpu_custom_call.1} parent=5 // pred_check_branch
        %171 = sbr.rel (%p168) target = $region32
      $region31: #{tpu_custom_call.1} parent=5 // pred_region
        %s172 = ssub.s32 %s16, 1
        %s173 = sand.u32 %s29, 1
        %s174 = scalar_lea.sflag [#allocation3], %s173
        %s175 = sand.u32 %s29, 1
        %s176 = smul.addr %s175, 16
        %s177 = scalar_lea.vmem [#allocation2], %s176
        // Predicated region
        $region33: #{tpu_custom_call.1} parent=31 // pred_check
          %p178 = pneg %p42
        $region34: #{tpu_custom_call.1} parent=31 // pred_check_branch
          %180 = sbr.rel (%p178) target = $region36
        $region35: #{tpu_custom_call.1} parent=31 // pred_region
          %181 = dma.done %s174, 256
        $region36: #{tpu_custom_call.1} parent=31 // pred_fallthru
          _
        // Predicated region
        $region37: #{tpu_custom_call.1} parent=31 // pred_check
          %p182 = pneg %p63
        $region38: #{tpu_custom_call.1} parent=31 // pred_check_branch
          %184 = sbr.rel (%p182) target = $region40
        $region39: #{tpu_custom_call.1} parent=31 // pred_region
          %185 = dma.done [#allocation6], 512
        $region40: #{tpu_custom_call.1} parent=31 // pred_fallthru
          _
        %s186 = sand.u32 %s29, 1
        %s187 = scalar_lea.sflag [#allocation3], %s186
        %s188 = sand.u32 %s29, 1
        %s189 = smul.addr %s188, 16
        %s190 = scalar_lea.vmem [#allocation2], %s189
        %p191 = pneg %p42
        %p192 = pneg %p39
        %p193 = pneg %p63
        %p194 = pneg %p60
        %p195 = pneg %p84
        %p196 = pneg %p81
        %p197 = pneg %p110
        %p198 = pneg %p107
        %s199 = sand.u32 %s97, 1
        %s200 = scalar_lea.sflag [#allocation4], %s199
        %s201 = sand.u32 %s97, 1
        %s202 = smul.addr %s201, 16
        %s203 = scalar_lea.vmem [#allocation7], %s202
        %s204 = smul.u32 2, %s21
        %s205 = smul.u32 2, %s21
        %v206 = vld [vmem:[%s177] sm:$0xff]
        %v207 = vld [vmem:[%s177 + $0x8] sm:$0xff]
        %v208 = vld [vmem:[#allocation5] sm:$0xff]
        %v209 = vld [vmem:[#allocation5 + $0x8] sm:$0xff]
        %v210 = vld [vmem:[#allocation5 + $0x10] sm:$0xff]
        %v211 = vld [vmem:[#allocation5 + $0x18] sm:$0xff]
        %v212 = vld [vmem:[%s2] sm:$0x1]
        %v214 = vlaneseq
        %v215 = vshrl.u32 %v214, 7
        %v216 = vsub.s32 0, %v215
        %v217 = vrot.slane %v212, %v216
        %vm219 = vcmask 261120
        %v221 = vsel %vm219, %v206, 0
        %v224 = vsel %vm219, %v207, 0
        %226 = vmatprep.subr.mxu0 0.0
        %227 = vmatpush1.msra.mxu0 %v208
        %228 = vmatprep.subr.mxu0 0.0
        %229 = vmatpush1.msra.mxu0 %v209
        %230 = vmatprep.subr.mxu0 0.0
        %231 = vmatpush1.msra.mxu0 %v210
        %232 = vmatprep.subr.mxu0 0.0
        %233 = vmatpush1.msra.mxu0 %v211
        %234 = vmatprep.subr.mxu0 0.0
        %235 = vmatpush1.msra.mxu0 0.0
        %236 = vmatprep.subr.mxu0 0.0
        %237 = vmatpush1.msra.mxu0 0.0
        %238 = vmatprep.subr.mxu0 0.0
        %239 = vmatpush1.msra.mxu0 0.0
        %240 = vmatprep.subr.mxu0 0.0
        %241 = vmatpush1.msra.mxu0 0.0
        %242 = vmatprep.subr.mxu0 0.0
        %243 = vmatpush1.msra.mxu0 0.0
        %244 = vmatprep.subr.mxu0 0.0
        %245 = vmatpush1.msra.mxu0 0.0
        %246 = vmatprep.subr.mxu0 0.0
        %247 = vmatpush1.msra.mxu0 0.0
        %248 = vmatprep.subr.mxu0 0.0
        %249 = vmatpush1.msra.mxu0 0.0
        %250 = vmatprep.subr.mxu0 0.0
        %251 = vmatpush1.msra.mxu0 0.0
        %252 = vmatprep.subr.mxu0 0.0
        %253 = vmatpush1.msra.mxu0 0.0
        %254 = vmatprep.subr.mxu0 0.0
        %255 = vmatpush1.msra.mxu0 0.0
        %256 = vmatprep.subr.mxu0 0.0
        %257 = vmatpush1.msra.mxu0 0.0
        %258 = vmatprep.subr.mxu0 0.0
        %259 = vmatpush1.msra.mxu0 0.0
        %260 = vmatprep.subr.mxu0 0.0
        %261 = vmatpush1.msra.mxu0 0.0
        %262 = vmatprep.subr.mxu0 0.0
        %263 = vmatpush1.msra.mxu0 0.0
        %264 = vmatprep.subr.mxu0 0.0
        %265 = vmatpush1.msra.mxu0 0.0
        %266 = vmatprep.subr.mxu0 0.0
        %267 = vmatpush1.msra.mxu0 0.0
        %268 = vmatprep.subr.mxu0 0.0
        %269 = vmatpush1.msra.mxu0 0.0
        %270 = vmatprep.subr.mxu0 0.0
        %271 = vmatpush1.msra.mxu0 0.0
        %272 = vmatprep.subr.mxu0 0.0
        %273 = vmatpush1.msra.mxu0 0.0
        %274 = vmatprep.subr.mxu0 0.0
        %275 = vmatpush1.msra.mxu0 0.0
        %276 = vmatprep.subr.mxu0 0.0
        %277 = vmatpush1.msra.mxu0 0.0
        %278 = vmatprep.subr.mxu0 0.0
        %279 = vmatpush1.msra.mxu0 0.0
        %280 = vmatprep.subr.mxu0 0.0
        %281 = vmatpush1.msra.mxu0 0.0
        %282 = vmatprep.subr.mxu0 0.0
        %283 = vmatpush1.msra.mxu0 0.0
        %284 = vmatprep.subr.mxu0 0.0
        %285 = vmatpush1.msra.mxu0 0.0
        %286 = vmatprep.subr.mxu0 0.0
        %287 = vmatpush1.msra.mxu0 0.0
        %288 = vmatprep.subr.mxu0 0.0
        %289 = vmatpush1.msra.mxu0 0.0
        %290 = vmatprep.mubr.f32.mxu0 0.0
        %291 = vmatmul.mubr.f32.gmra.mrb[0].mxu0 %v221
        %v292 = vpop.f32.mrb[0].mxu0
        %v293 = vadd.f32 %v217, %v292
        %v294 = vpop.f32.mrb[0].mxu0
        %295 = vmatprep.mubr.f32.mxu0 0.0
        %296 = vmatmul.mubr.f32.gmra.mrb[0].mxu0 %v224
        %v297 = vpop.f32.mrb[0].mxu0
        %v298 = vadd.f32 %v217, %v297
        %v299 = vpop.f32.mrb[0].mxu0
        %300 = vdwg.mxu0
        %301 = vst [vmem:[%s203] sm:$0xff] %v293
        %302 = vst [vmem:[%s203 + $0x8] sm:$0xff] %v298
        %s303 = sand.u32 %s97, 1
        %s304 = scalar_lea.sflag [#allocation4], %s303
        %s305 = sand.u32 %s97, 1
        %s306 = smul.addr %s305, 16
        %s307 = scalar_lea.vmem [#allocation7], %s306
        // Predicated region
        $region41: #{tpu_custom_call.1} parent=31 // pred_check
          %p308 = pneg %p107
        $region42: #{tpu_custom_call.1} parent=31 // pred_check_branch
          %310 = sbr.rel (%p308) target = $region44
        $region43: #{tpu_custom_call.1} parent=31 // pred_region
          %s311 = smul.u32 2, %s21
          %s313 = ssub.s32 256, 256
          %314 = vsyncadd %s304, %s313
          %s315 = smul.addr %s311, 128
          %s316 = scalar_lea.hbm %s3, %s315
          %s317 = sshll.u32 %s307, 4
          %s318 = int_to_ptr.vmem [resolvable:$true] %s317
          %323 = dma.vmem_to_hbm [thread:$0]  %s318, 256, %s316, %s304, 128, 128, 8
        $region44: #{tpu_custom_call.1} parent=31 // pred_fallthru
          _
      $region32: #{tpu_custom_call.1} parent=5 // pred_fallthru
        _
      %p324 = scmp.le.s32.totalorder 2, %s16
      // Predicated region
      $region45: #{tpu_custom_call.1} parent=5 // pred_check
        %p325 = pneg %p324
      $region46: #{tpu_custom_call.1} parent=5 // pred_check_branch
        %327 = sbr.rel (%p325) target = $region48
      $region47: #{tpu_custom_call.1} parent=5 // pred_region
        %s328 = ssub.s32 %s16, 2
        // Predicated region
        $region49: #{tpu_custom_call.1} parent=47 // pred_check
          %p329 = pneg %p113
        $region50: #{tpu_custom_call.1} parent=47 // pred_check_branch
          %331 = sbr.rel (%p329) target = $region52
        $region51: #{tpu_custom_call.1} parent=47 // pred_region
          %s332 = sand.u32 %s98, 1
          %s333 = scalar_lea.sflag [#allocation4], %s332
          %s334 = sand.u32 %s98, 1
          %s335 = smul.addr %s334, 16
          %s336 = scalar_lea.vmem [#allocation7], %s335
          %337 = dma.done %s333, 256
        $region52: #{tpu_custom_call.1} parent=47 // pred_fallthru
          _
      $region48: #{tpu_custom_call.1} parent=5 // pred_fallthru
        _
    $region6: #{tpu_custom_call.1} parent=1 // loop_footer
      %s20 = sadd.s32 1, %s16
    $region7: #{tpu_custom_call.1} parent=1 // loop_footer_branch
      %15 = sbr.rel target = $region3
    $region8: #{tpu_custom_call.1} parent=1 // loop_exit
      _
    %338 = vsyncpa [#allocation3], 1
    %s339 = scalar_lea.sflag [#allocation3], 1
    %340 = vsyncpa %s339, 1
    %341 = vsyncpa [#allocation6], 1
    %342 = vsyncpa [#allocation4], 1
    %s343 = scalar_lea.sflag [#allocation4], 1
    %344 = vsyncpa %s343, 1

</llo_original>
